<compile_context>
chip_gen: v6e
topology: v6e:2x2x1
jax: 0.10.0
libtpu: 0.0.40
codegen_flags: <defaults>
</compile_context>

<pallas_src>
import functools

import numpy as np
import jax
import jax.numpy as jnp
from jax import lax
from jax.experimental import pallas as pl
from jax.experimental.pallas import tpu as pltpu


_N_SHARDS = 2   # split of the N-stream; "parallel" leading grid axis (dual-TC on v7x)


def _round_up(x, m):
    return ((x + m - 1) // m) * m


def _pick_tile(n, d, emb_bytes, requested=None):
    """Largest 128-multiple tile keeping in-flight VMEM ~<= 20 MiB (v7x-safe)."""
    if requested is not None:
        tile = _round_up(max(int(requested), 128), 128)
    else:
        budget = 20 * 1024 * 1024
        # ~5 tile-sized buffers in flight: double-buffered HBM stream (x2), the
        # E*E temporary, the (Kp,T)/(2Kp,T) assignment operands, + headroom.
        per_row = 5 * d * emb_bytes + 64
        tile = max(128, (budget // per_row) // 128 * 128)
        tile = min(tile, 4096)
    # Don't over-pad tiny batches: each of the two N-shards needs >= 1 tile.
    tile = min(tile, _round_up(max((n + _N_SHARDS - 1) // _N_SHARDS, 1), 128))
    return tile


def _accumulate_kernel(emb_ref, mass_ref, lab_ref, me_ref, sq_ref, ct_ref,
                       *, mass_exp, kp):
    """Streaming per-cluster partial sums for one N-tile of one shard."""
    step = pl.program_id(1)

    @pl.when(step == 0)
    def _init():
        me_ref[...] = jnp.zeros_like(me_ref)
        sq_ref[...] = jnp.zeros_like(sq_ref)
        ct_ref[...] = jnp.zeros_like(ct_ref)

    E = emb_ref[...]                                  # (T, D) native dtype (bf16/f32)
    m = mass_ref[...]                                 # (1, T) f32, padding == 1
    lab = lab_ref[...]                                # (1, T) int32, padding == -1
    t = E.shape[0]
    cdtype = E.dtype

    # mass ** mass_exp, zero-safe (mass_exp is a compile-time constant).
    # (Negative masses are undefined in the reference as well.)
    if mass_exp == 0.0:
        m_pow = jnp.ones_like(m)
    elif mass_exp == 1.0:
        m_pow = m
    else:
        m_pow = jnp.where(
            m > 0.0,
            jnp.exp(np.float32(mass_exp) *
                    jnp.log(jnp.maximum(m, np.float32(1e-30)))),
            0.0)

    # (Kp, T) one-hot assignment built in-kernel (exact in any dtype; padded
    # rows/cols are zero).  Kept in the embedding dtype so the MXU runs its
    # native bf16 path and nothing (T, D)-sized is materialized in f32.
    cl_ids = lax.broadcasted_iota(jnp.int32, (kp, t), 0)
    A = (cl_ids == lab).astype(cdtype)                # (Kp, T)
    W = A * m_pow.astype(cdtype)                      # (Kp, T)
    L = jnp.concatenate([W, A], axis=0)               # (2Kp, T) shared MXU LHS

    ones_col = jnp.ones((t, 1), dtype=cdtype)
    me_ref[...] += jnp.dot(L, E, preferred_element_type=jnp.float32)        # [Σ m e ; Σ e]
    sq_ref[...] += jnp.dot(A, E * E, preferred_element_type=jnp.float32)    # Σ e² per dim
    ct_ref[...] += jnp.dot(L, ones_col, preferred_element_type=jnp.float32)  # [Σ m ; count]


def _finalize_kernel(me_ref, sq_ref, ct_ref, qq_ref, out_ref,
                     *, alpha, num_clusters, num_pairs, kp):
    """Combine shard partials, build centroids, intra + inter losses."""
    me = me_ref[0] + me_ref[1]                        # (2Kp, D)
    sq = sq_ref[0] + sq_ref[1]                        # (Kp, D)
    ct = ct_ref[0] + ct_ref[1]                        # (2Kp, 1)

    wsum = me[0:kp, :]                                # Σ m e
    esum = me[kp:2 * kp, :]                           # Σ e
    wden = ct[0:kp, :]                                # Σ m
    cnt = ct[kp:2 * kp, :]                            # counts

    valid = cnt > 0.5                                 # padded / empty cluster rows
    safe_cnt = jnp.where(valid, cnt, 1.0)
    safe_den = jnp.where(valid, wden, 1.0)
    C = wsum / safe_den                               # (Kp, D) centroids

    # intra_c = (Σ||e||² − 2 c·Σe + n_c ||c||²) / n_c
    e2sum = jnp.sum(sq, axis=1, keepdims=True)        # (Kp, 1)
    cdot = jnp.sum(C * esum, axis=1, keepdims=True)
    cn = jnp.sum(C * C, axis=1, keepdims=True)
    per_cluster = (e2sum - 2.0 * cdot + safe_cnt * cn) / safe_cnt
    loss_intra = (jnp.sum(jnp.where(valid, per_cluster, 0.0))
                  * np.float32(1.0 / num_clusters))

    # inter: mean_{c<d} q_c q_d / ||C_c − C_d||  via Gram form + masked rsqrt.
    G = lax.dot_general(C, C, (((1,), (1,)), ((), ())),
                        preferred_element_type=jnp.float32)        # (Kp, Kp) = C Cᵀ
    ii = lax.broadcasted_iota(jnp.int32, (kp, kp), 0)
    jj = lax.broadcasted_iota(jnp.int32, (kp, kp), 1)
    diag_row = jnp.sum(G * (ii == jj).astype(jnp.float32),
                       axis=0, keepdims=True)                      # (1, Kp) diag(G)
    d2 = cn + diag_row - 2.0 * G                                   # (Kp, Kp)
    pair_mask = (ii < jj) & (jj < num_clusters)
    inter_terms = jnp.where(
        pair_mask,
        qq_ref[...] * lax.rsqrt(jnp.maximum(d2, np.float32(1e-30))),
        0.0)
    inter_scaled = jnp.sum(inter_terms) * np.float32(alpha / num_pairs)

    out_ref[...] = jnp.zeros_like(out_ref)
    out_ref[0, 0] = loss_intra + inter_scaled
    out_ref[0, 1] = loss_intra
    out_ref[0, 2] = inter_scaled


def cluster_loss(embeddings, labels, mass, size_map, *, alpha, mass_exp, q_exp,
                 tile_n=None):
    """embeddings: (N, D) f32/bf16; labels: host int sequence; mass: (N,) f32;
    size_map: dict label -> size.  Returns (loss, loss_intra, alpha*loss_inter)."""
    embeddings = jnp.asarray(embeddings)
    if embeddings.dtype not in (jnp.float32, jnp.bfloat16):
        embeddings = embeddings.astype(jnp.float32)
    N, D = embeddings.shape

    # --- host-side glue: dict grouping by label (no Pallas equivalent) --------
    labels_list = [int(l) for l in np.asarray(labels).reshape(-1).tolist()]
    label_to_cluster = {}
    for l in labels_list:
        if l not in label_to_cluster:
            label_to_cluster[l] = len(label_to_cluster)
    K = len(label_to_cluster)
    assert K >= 2, "need at least two clusters for the inter-cluster term"
    num_pairs = K * (K - 1) // 2
    Kp = max(8, _round_up(K, 8))

    emb_bytes = 2 if embeddings.dtype == jnp.bfloat16 else 4
    tile = _pick_tile(N, D, emb_bytes, tile_n)
    steps = max(1, -(-N // (_N_SHARDS * tile)))
    n_pad = _N_SHARDS * steps * tile
    pad = n_pad - N

    cluster_ids = np.full((1, n_pad), -1, np.int32)                 # -1 => padding
    cluster_ids[0, :N] = np.asarray(
        [label_to_cluster[l] for l in labels_list], np.int32)

    # q ** q_exp and its upper-triangular pair products are tiny and host-known
    # (avoids the in-kernel log/exp of q and its 0**0 edge case).
    q_pow = np.zeros((Kp,), np.float64)
    for l, c in label_to_cluster.items():
        q_pow[c] = float(size_map[l]) ** q_exp
    qq = np.zeros((Kp, Kp), np.float32)
    for i in range(K):
        for j in range(i + 1, K):
            qq[i, j] = q_pow[i] * q_pow[j]

    emb_p = jnp.pad(embeddings, ((0, pad), (0, 0)))
    mass_row = jnp.pad(jnp.asarray(mass, jnp.float32).reshape(1, N),
                       ((0, 0), (0, pad)), constant_values=1.0)
    lab_row = jnp.asarray(cluster_ids)
    qq_j = jnp.asarray(qq)

    # ---- phase 1: streaming per-cluster partial accumulation -----------------
    acc_kernel = functools.partial(_accumulate_kernel,
                                   mass_exp=float(mass_exp), kp=Kp)
    me, sq, ct = pl.pallas_call(
        acc_kernel,
        grid=(_N_SHARDS, steps),
        in_specs=[
            pl.BlockSpec((tile, D), lambda c, i: (c * steps + i, 0)),   # embeddings
            pl.BlockSpec((1, tile), lambda c, i: (0, c * steps + i)),   # mass
            pl.BlockSpec((1, tile), lambda c, i: (0, c * steps + i)),   # cluster ids
        ],
        out_specs=(
            pl.BlockSpec((None, 2 * Kp, D), lambda c, i: (c, 0, 0)),
            pl.BlockSpec((None, Kp, D), lambda c, i: (c, 0, 0)),
            pl.BlockSpec((None, 2 * Kp, 1), lambda c, i: (c, 0, 0)),
        ),
        out_shape=(
            jax.ShapeDtypeStruct((_N_SHARDS, 2 * Kp, D), jnp.float32),
            jax.ShapeDtypeStruct((_N_SHARDS, Kp, D), jnp.float32),
            jax.ShapeDtypeStruct((_N_SHARDS, 2 * Kp, 1), jnp.float32),
        ),
        compiler_params=pltpu.CompilerParams(
            dimension_semantics=("parallel", "arbitrary"),
            vmem_limit_bytes=40 * 1024 * 1024),
    )(emb_p, mass_row, lab_row)
    # NOTE: pipeline_mode=pl.Buffered(3) on the embedding spec is an optional
    # v6e tweak; left at the default depth for portability.

    # ---- phase 2: tiny finalize (combine shards, centroids, intra + inter) ---
    fin_kernel = functools.partial(_finalize_kernel, alpha=float(alpha),
                                   num_clusters=K, num_pairs=num_pairs, kp=Kp)
    out = pl.pallas_call(
        fin_kernel,
        grid=(1,),
        in_specs=[
            pl.BlockSpec((_N_SHARDS, 2 * Kp, D), lambda i: (0, 0, 0)),
            pl.BlockSpec((_N_SHARDS, Kp, D), lambda i: (0, 0, 0)),
            pl.BlockSpec((_N_SHARDS, 2 * Kp, 1), lambda i: (0, 0, 0)),
            pl.BlockSpec((Kp, Kp), lambda i: (0, 0)),
        ],
        out_specs=pl.BlockSpec((1, 128), lambda i: (0, 0)),
        out_shape=jax.ShapeDtypeStruct((1, 128), jnp.float32),
    )(me, sq, ct, qq_j)

    return out[0, 0], out[0, 1], out[0, 2]


def _reference_numpy(embeddings, labels, mass, size_map, alpha, mass_exp, q_exp):
    emb = np.asarray(embeddings, np.float64)
    mass = np.asarray(mass, np.float64) ** mass_exp
    labels_to_idx = {}
    for idx, l in enumerate(np.asarray(labels).reshape(-1).tolist()):
        labels_to_idx.setdefault(int(l), []).append(idx)
    centroids, q = [], []
    loss_intra = 0.0
    for aff_id, idx_list in labels_to_idx.items():
        q.append(size_map[aff_id])
        cluster = emb[idx_list]
        cm = mass[idx_list]
        centroid = (cluster * cm[:, None]).sum(0) / cm.sum()
        centroids.append(centroid)
        loss_intra += ((cluster - centroid) ** 2).sum(-1).mean()
    loss_intra /= len(labels_to_idx)
    C = np.stack(centroids)
    K = C.shape[0]
    pds, qqs = [], []
    qarr = np.asarray(q, np.float64) ** q_exp
    for i in range(K):
        for j in range(i + 1, K):
            pds.append(np.linalg.norm(C[i] - C[j]))
            qqs.append(qarr[i] * qarr[j])
    loss_inter = float(np.mean(np.asarray(qqs) / np.asarray(pds)))
    return (loss_intra + alpha * loss_inter, loss_intra, alpha * loss_inter)


if __name__ == "__main__":
    alpha, mass_exp, q_exp = 0.1, 0.5, 0.3

    def run_case(key, n, d, labels, size_map, tile_n, dtype, tol):
        k1, k2 = jax.random.split(key)
        emb = jax.random.normal(k1, (n, d), dtype=jnp.float32)
        if dtype == jnp.bfloat16:
            emb = emb.astype(jnp.bfloat16)
        mass = jax.random.uniform(k2, (n,), minval=0.5, maxval=1.5,
                                  dtype=jnp.float32)

        loss, intra, inter = cluster_loss(
            emb, labels, mass, size_map,
            alpha=alpha, mass_exp=mass_exp, q_exp=q_exp, tile_n=tile_n)
        loss, intra, inter = jax.block_until_ready((loss, intra, inter))
        got = (float(loss), float(intra), float(inter))

        emb_np = np.asarray(emb.astype(jnp.float32))
        ref = _reference_numpy(emb_np, labels, np.asarray(mass), size_map,
                               alpha, mass_exp, q_exp)
        for g, r in zip(got, ref):
            assert abs(g - r) <= tol * max(1.0, abs(r)), (str(dtype), got, ref)

    key = jax.random.PRNGKey(0)
    k1, k2, k3 = jax.random.split(key, 3)

    # Small case (auto tile, 1 step per shard).
    labels_small = [0, 1, 0, 2, 1, 0, 2, 1]
    size_small = {0: 3.0, 1: 2.0, 2: 5.0}
    run_case(k1, 8, 32, labels_small, size_small, tile_n=None,
             dtype=jnp.float32, tol=1e-4)

    # Multi-step case (N=320, tile 128 -> 2 steps per shard): exercises the
    # streaming accumulation across the "arbitrary" axis plus the shard split.
    n_big = 320
    labels_big = [(i * 7) % 5 for i in range(n_big)]
    size_big = {0: 3.0, 1: 2.0, 2: 5.0, 3: 1.5, 4: 4.0}
    run_case(k2, n_big, 64, labels_big, size_big, tile_n=128,
             dtype=jnp.float32, tol=1e-4)

    # bf16 embedding stream (halves HBM traffic); MXU consumes bf16 directly
    # with f32 accumulation, so tolerance is bf16-compute-level.
    run_case(k3, n_big, 64, labels_big, size_big, tile_n=None,
             dtype=jnp.bfloat16, tol=3e-3)

    print("KERNEL_OK")
</pallas_src>

<mosaic_0001>
module attributes {stable_mosaic.version = 11 : i64} {
  func.func @_accumulate_kernel(%arg0: i32, %arg1: i32, %arg2: memref<128x32xf32, #tpu.memory_space<vmem>>, %arg3: memref<1x128xf32, #tpu.memory_space<vmem>>, %arg4: memref<1x128xi32, #tpu.memory_space<vmem>>, %arg5: memref<1x16x32xf32, #tpu.memory_space<vmem>>, %arg6: memref<1x8x32xf32, #tpu.memory_space<vmem>>, %arg7: memref<1x16x1xf32, #tpu.memory_space<vmem>>) attributes {dimension_semantics = [#tpu.dimension_semantics<parallel>, #tpu.dimension_semantics<arbitrary>], iteration_bounds = array<i64: 2, 1>, scalar_prefetch = 0 : i64, scratch_operands = 0 : i64, tpu.core_type = #tpu.core_type<tc>, window_params = [{transform_indices = @transform_0, window_bounds = array<i64: 128, 32>}, {transform_indices = @transform_1, window_bounds = array<i64: 1, 128>}, {transform_indices = @transform_2, window_bounds = array<i64: 1, 128>}, {transform_indices = @transform_3, window_bounds = array<i64: 1, 16, 32>}, {transform_indices = @transform_4, window_bounds = array<i64: 1, 8, 32>}, {transform_indices = @transform_5, window_bounds = array<i64: 1, 16, 1>}]} {
    %c0_i32 = arith.constant 0 : i32
    %0 = arith.cmpi eq, %arg1, %c0_i32 : i32
    %1 = arith.extui %0 : i1 to i32
    %c0_i32_0 = arith.constant 0 : i32
    %2 = arith.cmpi ne, %1, %c0_i32_0 : i32
    scf.if %2 {
      %cst_31 = arith.constant 0.000000e+00 : f32
      %47 = vector.broadcast %cst_31 : f32 to vector<16x32xf32>
      %c0_32 = arith.constant 0 : index
      %c0_33 = arith.constant 0 : index
      %c0_34 = arith.constant 0 : index
      %48 = vector.load %arg5[%c0_32, %c0_33, %c0_34] : memref<1x16x32xf32, #tpu.memory_space<vmem>>, vector<1x16x32xf32>
      %49 = vector.shape_cast %48 : vector<1x16x32xf32> to vector<16x32xf32>
      %50 = vector.shape_cast %47 : vector<16x32xf32> to vector<1x16x32xf32>
      tpu.vector_store %arg5[%c0_32, %c0_33, %c0_34], %50 {strides = array<i32>} : memref<1x16x32xf32, #tpu.memory_space<vmem>>, vector<1x16x32xf32>,
      %cst_35 = arith.constant 0.000000e+00 : f32
      %51 = vector.broadcast %cst_35 : f32 to vector<8x32xf32>
      %c0_36 = arith.constant 0 : index
      %c0_37 = arith.constant 0 : index
      %c0_38 = arith.constant 0 : index
      %52 = vector.load %arg6[%c0_36, %c0_37, %c0_38] : memref<1x8x32xf32, #tpu.memory_space<vmem>>, vector<1x8x32xf32>
      %53 = vector.shape_cast %52 : vector<1x8x32xf32> to vector<8x32xf32>
      %54 = vector.shape_cast %51 : vector<8x32xf32> to vector<1x8x32xf32>
      tpu.vector_store %arg6[%c0_36, %c0_37, %c0_38], %54 {strides = array<i32>} : memref<1x8x32xf32, #tpu.memory_space<vmem>>, vector<1x8x32xf32>,
      %cst_39 = arith.constant 0.000000e+00 : f32
      %55 = vector.broadcast %cst_39 : f32 to vector<16x1xf32>
      %c0_40 = arith.constant 0 : index
      %c0_41 = arith.constant 0 : index
      %c0_42 = arith.constant 0 : index
      %56 = vector.load %arg7[%c0_40, %c0_41, %c0_42] : memref<1x16x1xf32, #tpu.memory_space<vmem>>, vector<1x16x1xf32>
      %57 = vector.shape_cast %56 : vector<1x16x1xf32> to vector<16x1xf32>
      %58 = vector.shape_cast %55 : vector<16x1xf32> to vector<1x16x1xf32>
      tpu.vector_store %arg7[%c0_40, %c0_41, %c0_42], %58 {strides = array<i32>} : memref<1x16x1xf32, #tpu.memory_space<vmem>>, vector<1x16x1xf32>,
    } else {
    }
    %c0 = arith.constant 0 : index
    %c0_1 = arith.constant 0 : index
    %3 = vector.load %arg2[%c0, %c0_1] : memref<128x32xf32, #tpu.memory_space<vmem>>, vector<128x32xf32>
    %c0_2 = arith.constant 0 : index
    %c0_3 = arith.constant 0 : index
    %4 = vector.load %arg3[%c0_2, %c0_3] : memref<1x128xf32, #tpu.memory_space<vmem>>, vector<1x128xf32>
    %c0_4 = arith.constant 0 : index
    %c0_5 = arith.constant 0 : index
    %5 = vector.load %arg4[%c0_4, %c0_5] : memref<1x128xi32, #tpu.memory_space<vmem>>, vector<1x128xi32>
    %cst = arith.constant 0.000000e+00 : f32
    %6 = vector.broadcast %cst : f32 to vector<1x128xf32>
    %7 = arith.cmpf ogt, %4, %6 : vector<1x128xf32>
    %cst_6 = arith.constant 1.000000e-30 : f32
    %8 = vector.broadcast %cst_6 : f32 to vector<1x128xf32>
    %9 = arith.maximumf %4, %8 : vector<1x128xf32>
    %10 = math.log %9 : vector<1x128xf32>
    %cst_7 = arith.constant 5.000000e-01 : f32
    %11 = vector.broadcast %cst_7 : f32 to vector<1x128xf32>
    %12 = arith.mulf %11, %10 : vector<1x128xf32>
    %13 = math.exp %12 : vector<1x128xf32>
    %cst_8 = arith.constant 0.000000e+00 : f32
    %14 = vector.broadcast %cst_8 : f32 to vector<1x128xf32>
    %15 = arith.select %7, %13, %14 : vector<1x128xi1>, vector<1x128xf32>
    %16 = tpu.iota {dimensions = array<i32: 0>} : vector<8x128xi32>
    %17 = vector.broadcast %5 : vector<1x128xi32> to vector<8x128xi32>
    %18 = arith.cmpi eq, %16, %17 : vector<8x128xi32>
    %19 = arith.extui %18 : vector<8x128xi1> to vector<8x128xi32>
    %20 = arith.sitofp %19 : vector<8x128xi32> to vector<8x128xf32>
    %21 = vector.broadcast %15 : vector<1x128xf32> to vector<8x128xf32>
    %22 = arith.mulf %20, %21 : vector<8x128xf32>
    %23 = tpu.concatenate %22, %20 in 0 : vector<8x128xf32>, vector<8x128xf32> -> vector<16x128xf32>
    %cst_9 = arith.constant 1.000000e+00 : f32
    %24 = vector.broadcast %cst_9 : f32 to vector<128x1xf32>
    %c0_10 = arith.constant 0 : index
    %c0_11 = arith.constant 0 : index
    %c0_12 = arith.constant 0 : index
    %25 = vector.load %arg5[%c0_10, %c0_11, %c0_12] : memref<1x16x32xf32, #tpu.memory_space<vmem>>, vector<1x16x32xf32>
    %26 = vector.shape_cast %25 : vector<1x16x32xf32> to vector<16x32xf32>
    %cst_13 = arith.constant dense<0.000000e+00> : vector<16x32xf32>
    %27 = tpu.matmul %23, %3, %cst_13 {dimension_numbers = #tpu.dot_dimension_numbers<[1], [0], [0], [1], [0, 0, 1, 1], [], []>} : vector<16x128xf32>, vector<128x32xf32>, vector<16x32xf32> -> vector<16x32xf32>
    %28 = arith.addf %26, %27 : vector<16x32xf32>
    %c0_14 = arith.constant 0 : index
    %c0_15 = arith.constant 0 : index
    %c0_16 = arith.constant 0 : index
    %29 = vector.load %arg5[%c0_14, %c0_15, %c0_16] : memref<1x16x32xf32, #tpu.memory_space<vmem>>, vector<1x16x32xf32>
    %30 = vector.shape_cast %29 : vector<1x16x32xf32> to vector<16x32xf32>
    %31 = vector.shape_cast %28 : vector<16x32xf32> to vector<1x16x32xf32>
    tpu.vector_store %arg5[%c0_14, %c0_15, %c0_16], %31 {strides = array<i32>} : memref<1x16x32xf32, #tpu.memory_space<vmem>>, vector<1x16x32xf32>,
    %c0_17 = arith.constant 0 : index
    %c0_18 = arith.constant 0 : index
    %c0_19 = arith.constant 0 : index
    %32 = vector.load %arg6[%c0_17, %c0_18, %c0_19] : memref<1x8x32xf32, #tpu.memory_space<vmem>>, vector<1x8x32xf32>
    %33 = vector.shape_cast %32 : vector<1x8x32xf32> to vector<8x32xf32>
    %34 = arith.mulf %3, %3 : vector<128x32xf32>
    %cst_20 = arith.constant dense<0.000000e+00> : vector<8x32xf32>
    %35 = tpu.matmul %20, %34, %cst_20 {dimension_numbers = #tpu.dot_dimension_numbers<[1], [0], [0], [1], [0, 0, 1, 1], [], []>} : vector<8x128xf32>, vector<128x32xf32>, vector<8x32xf32> -> vector<8x32xf32>
    %36 = arith.addf %33, %35 : vector<8x32xf32>
    %c0_21 = arith.constant 0 : index
    %c0_22 = arith.constant 0 : index
    %c0_23 = arith.constant 0 : index
    %37 = vector.load %arg6[%c0_21, %c0_22, %c0_23] : memref<1x8x32xf32, #tpu.memory_space<vmem>>, vector<1x8x32xf32>
    %38 = vector.shape_cast %37 : vector<1x8x32xf32> to vector<8x32xf32>
    %39 = vector.shape_cast %36 : vector<8x32xf32> to vector<1x8x32xf32>
    tpu.vector_store %arg6[%c0_21, %c0_22, %c0_23], %39 {strides = array<i32>} : memref<1x8x32xf32, #tpu.memory_space<vmem>>, vector<1x8x32xf32>,
    %c0_24 = arith.constant 0 : index
    %c0_25 = arith.constant 0 : index
    %c0_26 = arith.constant 0 : index
    %40 = vector.load %arg7[%c0_24, %c0_25, %c0_26] : memref<1x16x1xf32, #tpu.memory_space<vmem>>, vector<1x16x1xf32>
    %41 = vector.shape_cast %40 : vector<1x16x1xf32> to vector<16x1xf32>
    %cst_27 = arith.constant dense<0.000000e+00> : vector<16x1xf32>
    %42 = tpu.matmul %23, %24, %cst_27 {dimension_numbers = #tpu.dot_dimension_numbers<[1], [0], [0], [1], [0, 0, 1, 1], [], []>} : vector<16x128xf32>, vector<128x1xf32>, vector<16x1xf32> -> vector<16x1xf32>
    %43 = arith.addf %41, %42 : vector<16x1xf32>
    %c0_28 = arith.constant 0 : index
    %c0_29 = arith.constant 0 : index
    %c0_30 = arith.constant 0 : index
    %44 = vector.load %arg7[%c0_28, %c0_29, %c0_30] : memref<1x16x1xf32, #tpu.memory_space<vmem>>, vector<1x16x1xf32>
    %45 = vector.shape_cast %44 : vector<1x16x1xf32> to vector<16x1xf32>
    %46 = vector.shape_cast %43 : vector<16x1xf32> to vector<1x16x1xf32>
    tpu.vector_store %arg7[%c0_28, %c0_29, %c0_30], %46 {strides = array<i32>} : memref<1x16x1xf32, #tpu.memory_space<vmem>>, vector<1x16x1xf32>,
    return
  }
  func.func @transform_0(%arg0: i32, %arg1: i32) -> (i32, i32) {
    %c1_i32 = arith.constant 1 : i32
    %0 = arith.muli %arg0, %c1_i32 : i32
    %1 = arith.addi %0, %arg1 : i32
    %c0_i32 = arith.constant 0 : i32
    %c0_i32_0 = arith.constant 0 : i32
    return %1, %c0_i32 : i32, i32
  }
  func.func @transform_1(%arg0: i32, %arg1: i32) -> (i32, i32) {
    %c1_i32 = arith.constant 1 : i32
    %0 = arith.muli %arg0, %c1_i32 : i32
    %1 = arith.addi %0, %arg1 : i32
    %c0_i32 = arith.constant 0 : i32
    %c0_i32_0 = arith.constant 0 : i32
    return %c0_i32, %1 : i32, i32
  }
  func.func @transform_2(%arg0: i32, %arg1: i32) -> (i32, i32) {
    %c1_i32 = arith.constant 1 : i32
    %0 = arith.muli %arg0, %c1_i32 : i32
    %1 = arith.addi %0, %arg1 : i32
    %c0_i32 = arith.constant 0 : i32
    %c0_i32_0 = arith.constant 0 : i32
    return %c0_i32, %1 : i32, i32
  }
  func.func @transform_3(%arg0: i32, %arg1: i32) -> (i32, i32, i32) {
    %c0_i32 = arith.constant 0 : i32
    %c0_i32_0 = arith.constant 0 : i32
    %c0_i32_1 = arith.constant 0 : i32
    return %arg0, %c0_i32, %c0_i32_0 : i32, i32, i32
  }
  func.func @transform_4(%arg0: i32, %arg1: i32) -> (i32, i32, i32) {
    %c0_i32 = arith.constant 0 : i32
    %c0_i32_0 = arith.constant 0 : i32
    %c0_i32_1 = arith.constant 0 : i32
    return %arg0, %c0_i32, %c0_i32_0 : i32, i32, i32
  }
  func.func @transform_5(%arg0: i32, %arg1: i32) -> (i32, i32, i32) {
    %c0_i32 = arith.constant 0 : i32
    %c0_i32_0 = arith.constant 0 : i32
    %c0_i32_1 = arith.constant 0 : i32
    return %arg0, %c0_i32, %c0_i32_0 : i32, i32, i32
  }
}

</mosaic_0001>

<llo_original>
// kernel: tpu_custom_call.1
$region0: #{tpu_custom_call.1}
  #allocation0 [shape = 'u32[]', space=smem, size = 0x4, offset = 0x4, fixed_abs, tag = 'smem constant byte address 0x4 - core index']
  #allocation1 [shape = 'u32[144,128]{1,0:T(1,128)}', space=vmem, size = 0x12000, scoped, tag = 'internal scratch']
  %s0 = inlined_call_operand.vmem [shape: f32[256,32], index: 0, kind: input, shape index: {}]
  %s1 = inlined_call_operand.vmem [shape: f32[1,256], index: 1, kind: input, shape index: {}]
  %s2 = inlined_call_operand.vmem [shape: s32[1,256], index: 2, kind: input, shape index: {}]
  %s3 = inlined_call_operand.hbm [shape: f32[2,16,32], index: 3, kind: output, shape index: {0}]
  %s4 = inlined_call_operand.hbm [shape: f32[2,8,32], index: 4, kind: output, shape index: {1}]
  %s5 = inlined_call_operand.vmem [shape: f32[2,16,1], index: 5, kind: output, shape index: {2}]
  %6 = xla_tuple %s3, %s4, %s5
  %s7 = sld [smem:[#allocation0]]
  $region65: #{tpu_custom_call.1} parent=0
    _
  %s9 = ssub.s32 1, %s7
  %s10 = scalar_select 0, %s9, %s7
  $region1: #{tpu_custom_call.1} parent=0
    #allocation2 [shape = 'u8[16384]{0}', space=vmem, size = 0x4000, scoped, tag = 'output window, operand 0']
    #allocation3 [shape = 's32[2]{0}', space=sflag, size = 0x8, scoped, tag = 'scoped memory for tpu_custom_call.1']
    #allocation4 [shape = 'u8[8192]{0}', space=vmem, size = 0x2000, scoped, tag = 'output window, operand 1']
    #allocation5 [shape = 's32[2]{0}', space=sflag, size = 0x8, scoped, tag = 'scoped memory for tpu_custom_call.1']
    %11 = vsyncpa [#allocation3], 0
    %s12 = scalar_lea.sflag [#allocation3], 1
    %13 = vsyncpa %s12, 0
    %14 = vsyncpa [#allocation5], 0
    %s15 = scalar_lea.sflag [#allocation5], 1
    %16 = vsyncpa %s15, 0
    loop: start=0, step=1, limit=4
    $region2: #{tpu_custom_call.1} parent=1 // loop_pre_header
      _
    $region3: #{tpu_custom_call.1} parent=1 // loop_header
      %s18 = sphi 0, %s22
      %p19 = scmp.ge.s32.totalorder %s18, 4
      %s25 = sphi 0, %s37
      %s26 = sphi 0, %s33
      %s27 = sphi 0, %s25
      %s28 = sphi 0, %s26
      %s29 = sphi 0, %s27
      %s30 = sphi 0, %s28
      %s42 = sphi 0, %s44
      %s45 = sphi 0, %s42
      %s46 = sphi 0, %s45
      %s62 = sphi 0, %s46
      %s70 = sphi 0, %s72
      %s73 = sphi 0, %s70
      %s74 = sphi 0, %s73
      %s90 = sphi 0, %s74
      %s98 = sphi 0, %s100
      %s101 = sphi 0, %s98
      %s102 = sphi 0, %s101
      %s118 = sphi 0, %s102
      %s124 = sphi 0, %s126
      %s127 = sphi 0, %s124
      %s128 = sphi 0, %s127
      %s144 = sphi 0, %s128
      %s150 = sphi 0, %s152
      %s153 = sphi 0, %s150
      %s154 = sphi 0, %s153
      %s170 = sphi 0, %s154
      %s176 = sphi 0, %s178
      %s179 = sphi 0, %s176
      %s180 = sphi 0, %s179
      %s196 = sphi 0, %s180
    $region4: #{tpu_custom_call.1} parent=1 // loop_header_branch
      %21 = sbr.rel (%p19) target = $region8
    $region5: #{tpu_custom_call.1} parent=1 // loop_body
      %s23 = ssub.s32 %s18, 1
      %s24 = ssub.s32 %s18, 2
      %s31 = sadd.s32 1, %s26
      %p32 = scmp.ge.s32.totalorder %s31, 1
      %s33 = scalar_select %p32, 0, %s31
      %s34 = sadd.s32 1, %s25
      %s35 = scalar_select %p32, %s34, %s25
      %p36 = scmp.ge.s32.totalorder %s35, 2
      %s37 = scalar_select %p36, 0, %s35
      %s38 = sadd.s32 %s25, %s26
      %s39 = sadd.s32 %s37, %s33
      %s40 = ssub.s32 %s38, %s39
      %p41 = scmp.eq.s32.totalorder %s40, 0
      %s43 = sadd.s32 %s42, 1
      %s44 = scalar_select %p41, %s42, %s43
      %p47 = pneg %p41
      %p48 = scmp.eq.s32.totalorder %s18, 1
      %p49 = por %p47, %p48
      %p50 = scmp.ne.s32.totalorder %s42, %s45
      %p51 = scmp.eq.s32.totalorder %s18, 0
      %p52 = por %p50, %p51
      %p53 = scmp.ne.s32.totalorder %s42, %s45
      %p54 = scmp.eq.s32.totalorder %s23, 1
      %p55 = por %p53, %p54
      %p56 = scmp.ne.s32.totalorder %s45, %s46
      %p57 = scmp.eq.s32.totalorder %s23, 0
      %p58 = por %p56, %p57
      %p59 = scmp.ne.s32.totalorder %s45, %s46
      %p60 = scmp.eq.s32.totalorder %s24, 1
      %p61 = por %p59, %p60
      %p63 = scmp.ne.s32.totalorder %s46, %s62
      %p64 = scmp.eq.s32.totalorder %s24, 0
      %p65 = por %p63, %p64
      %s66 = sadd.s32 %s25, %s26
      %s67 = sadd.s32 %s37, %s33
      %s68 = ssub.s32 %s66, %s67
      %p69 = scmp.eq.s32.totalorder %s68, 0
      %s71 = sadd.s32 %s70, 1
      %s72 = scalar_select %p69, %s70, %s71
      %p75 = pneg %p69
      %p76 = scmp.eq.s32.totalorder %s18, 1
      %p77 = por %p75, %p76
      %p78 = scmp.ne.s32.totalorder %s70, %s73
      %p79 = scmp.eq.s32.totalorder %s18, 0
      %p80 = por %p78, %p79
      %p81 = scmp.ne.s32.totalorder %s70, %s73
      %p82 = scmp.eq.s32.totalorder %s23, 1
      %p83 = por %p81, %p82
      %p84 = scmp.ne.s32.totalorder %s73, %s74
      %p85 = scmp.eq.s32.totalorder %s23, 0
      %p86 = por %p84, %p85
      %p87 = scmp.ne.s32.totalorder %s73, %s74
      %p88 = scmp.eq.s32.totalorder %s24, 1
      %p89 = por %p87, %p88
      %p91 = scmp.ne.s32.totalorder %s74, %s90
      %p92 = scmp.eq.s32.totalorder %s24, 0
      %p93 = por %p91, %p92
      %s94 = sadd.s32 %s25, %s26
      %s95 = sadd.s32 %s37, %s33
      %s96 = ssub.s32 %s94, %s95
      %p97 = scmp.eq.s32.totalorder %s96, 0
      %s99 = sadd.s32 %s98, 1
      %s100 = scalar_select %p97, %s98, %s99
      %p103 = pneg %p97
      %p104 = scmp.eq.s32.totalorder %s18, 1
      %p105 = por %p103, %p104
      %p106 = scmp.ne.s32.totalorder %s98, %s101
      %p107 = scmp.eq.s32.totalorder %s18, 0
      %p108 = por %p106, %p107
      %p109 = scmp.ne.s32.totalorder %s98, %s101
      %p110 = scmp.eq.s32.totalorder %s23, 1
      %p111 = por %p109, %p110
      %p112 = scmp.ne.s32.totalorder %s101, %s102
      %p113 = scmp.eq.s32.totalorder %s23, 0
      %p114 = por %p112, %p113
      %p115 = scmp.ne.s32.totalorder %s101, %s102
      %p116 = scmp.eq.s32.totalorder %s24, 1
      %p117 = por %p115, %p116
      %p119 = scmp.ne.s32.totalorder %s102, %s118
      %p120 = scmp.eq.s32.totalorder %s24, 0
      %p121 = por %p119, %p120
      %s122 = ssub.s32 %s25, %s37
      %p123 = scmp.eq.s32.totalorder %s122, 0
      %s125 = sadd.s32 %s124, 1
      %s126 = scalar_select %p123, %s124, %s125
      %p129 = pneg %p123
      %p130 = scmp.eq.s32.totalorder %s18, 1
      %p131 = por %p129, %p130
      %p132 = scmp.ne.s32.totalorder %s124, %s127
      %p133 = scmp.eq.s32.totalorder %s18, 0
      %p134 = por %p132, %p133
      %p135 = scmp.ne.s32.totalorder %s124, %s127
      %p136 = scmp.eq.s32.totalorder %s23, 1
      %p137 = por %p135, %p136
      %p138 = scmp.ne.s32.totalorder %s127, %s128
      %p139 = scmp.eq.s32.totalorder %s23, 0
      %p140 = por %p138, %p139
      %p141 = scmp.ne.s32.totalorder %s127, %s128
      %p142 = scmp.eq.s32.totalorder %s24, 1
      %p143 = por %p141, %p142
      %p145 = scmp.ne.s32.totalorder %s128, %s144
      %p146 = scmp.eq.s32.totalorder %s24, 0
      %p147 = por %p145, %p146
      %s148 = ssub.s32 %s25, %s37
      %p149 = scmp.eq.s32.totalorder %s148, 0
      %s151 = sadd.s32 %s150, 1
      %s152 = scalar_select %p149, %s150, %s151
      %p155 = pneg %p149
      %p156 = scmp.eq.s32.totalorder %s18, 1
      %p157 = por %p155, %p156
      %p158 = scmp.ne.s32.totalorder %s150, %s153
      %p159 = scmp.eq.s32.totalorder %s18, 0
      %p160 = por %p158, %p159
      %p161 = scmp.ne.s32.totalorder %s150, %s153
      %p162 = scmp.eq.s32.totalorder %s23, 1
      %p163 = por %p161, %p162
      %p164 = scmp.ne.s32.totalorder %s153, %s154
      %p165 = scmp.eq.s32.totalorder %s23, 0
      %p166 = por %p164, %p165
      %p167 = scmp.ne.s32.totalorder %s153, %s154
      %p168 = scmp.eq.s32.totalorder %s24, 1
      %p169 = por %p167, %p168
      %p171 = scmp.ne.s32.totalorder %s154, %s170
      %p172 = scmp.eq.s32.totalorder %s24, 0
      %p173 = por %p171, %p172
      %s174 = ssub.s32 %s25, %s37
      %p175 = scmp.eq.s32.totalorder %s174, 0
      %s177 = sadd.s32 %s176, 1
      %s178 = scalar_select %p175, %s176, %s177
      %p181 = pneg %p175
      %p182 = scmp.eq.s32.totalorder %s18, 1
      %p183 = por %p181, %p182
      %p184 = scmp.ne.s32.totalorder %s176, %s179
      %p185 = scmp.eq.s32.totalorder %s18, 0
      %p186 = por %p184, %p185
      %p187 = scmp.ne.s32.totalorder %s176, %s179
      %p188 = scmp.eq.s32.totalorder %s23, 1
      %p189 = por %p187, %p188
      %p190 = scmp.ne.s32.totalorder %s179, %s180
      %p191 = scmp.eq.s32.totalorder %s23, 0
      %p192 = por %p190, %p191
      %p193 = scmp.ne.s32.totalorder %s179, %s180
      %p194 = scmp.eq.s32.totalorder %s24, 1
      %p195 = por %p193, %p194
      %p197 = scmp.ne.s32.totalorder %s180, %s196
      %p198 = scmp.eq.s32.totalorder %s24, 0
      %p199 = por %p197, %p198
      %p200 = scmp.le.s32.totalorder 1, %s18
      %p201 = scmp.lt.s32.totalorder %s18, 3
      %p202 = pnand %p200, %p201
      %p203 = pneg %p202
      // Predicated region
      $region9: #{tpu_custom_call.1} parent=5 // pred_check
        _
      $region10: #{tpu_custom_call.1} parent=5 // pred_check_branch
        %205 = sbr.rel (%p202) target = $region12
      $region11: #{tpu_custom_call.1} parent=5 // pred_region
        %s206 = ssub.s32 %s18, 1
      $region12: #{tpu_custom_call.1} parent=5 // pred_fallthru
        _
      %p207 = scmp.lt.s32.totalorder %s18, 2
      // Predicated region
      $region13: #{tpu_custom_call.1} parent=5 // pred_check
        %p208 = pneg %p207
      $region14: #{tpu_custom_call.1} parent=5 // pred_check_branch
        %210 = sbr.rel (%p208) target = $region16
      $region15: #{tpu_custom_call.1} parent=5 // pred_region
        // Predicated region
        $region17: #{tpu_custom_call.1} parent=15 // pred_check
          %p211 = pneg %p52
        $region18: #{tpu_custom_call.1} parent=15 // pred_check_branch
          %213 = sbr.rel (%p211) target = $region20
        $region19: #{tpu_custom_call.1} parent=15 // pred_region
          %s214 = sadd.s32 %s25, %s26
          %s215 = smul.u32 16, %s214
          %p216 = scmp.lt.s32.totalorder %s215, 31
          %s217 = scalar_select %p216, %s215, 31
          %s218 = smul.addr %s217, 8
          %s219 = scalar_lea.vmem %s0, %s218
          %s220 = sadd.s32 %s25, %s26
          %s221 = smul.u32 16, %s220
        $region20: #{tpu_custom_call.1} parent=15 // pred_fallthru
          _
        // Predicated region
        $region21: #{tpu_custom_call.1} parent=15 // pred_check
          %p222 = pneg %p80
        $region22: #{tpu_custom_call.1} parent=15 // pred_check_branch
          %224 = sbr.rel (%p222) target = $region24
        $region23: #{tpu_custom_call.1} parent=15 // pred_region
          %s225 = sadd.s32 %s25, %s26
          %p226 = scmp.lt.s32.totalorder %s225, 1
          %s227 = scalar_select %p226, %s225, 1
          %s228 = scalar_lea.vmem %s1, %s227
          %s229 = sadd.s32 %s25, %s26
        $region24: #{tpu_custom_call.1} parent=15 // pred_fallthru
          _
        // Predicated region
        $region25: #{tpu_custom_call.1} parent=15 // pred_check
          %p230 = pneg %p108
        $region26: #{tpu_custom_call.1} parent=15 // pred_check_branch
          %232 = sbr.rel (%p230) target = $region28
        $region27: #{tpu_custom_call.1} parent=15 // pred_region
          %s233 = sadd.s32 %s25, %s26
          %p234 = scmp.lt.s32.totalorder %s233, 1
          %s235 = scalar_select %p234, %s233, 1
          %s236 = scalar_lea.vmem %s2, %s235
          %s237 = sadd.s32 %s25, %s26
        $region28: #{tpu_custom_call.1} parent=15 // pred_fallthru
          _
      $region16: #{tpu_custom_call.1} parent=5 // pred_fallthru
        _
      %p238 = scmp.le.s32.totalorder 1, %s18
      %p239 = scmp.lt.s32.totalorder %s18, 3
      %p240 = pnand %p238, %p239
      %p241 = pneg %p240
      // Predicated region
      $region29: #{tpu_custom_call.1} parent=5 // pred_check
        _
      $region30: #{tpu_custom_call.1} parent=5 // pred_check_branch
        %243 = sbr.rel (%p240) target = $region32
      $region31: #{tpu_custom_call.1} parent=5 // pred_region
        %s244 = ssub.s32 %s18, 1
        %s245 = sadd.s32 %s27, %s28
        %s246 = smul.u32 16, %s245
        %p247 = scmp.lt.s32.totalorder %s246, 31
        %s248 = scalar_select %p247, %s246, 31
        %s249 = smul.addr %s248, 8
        %s250 = scalar_lea.vmem %s0, %s249
        %p251 = pneg %p58
        %p252 = pneg %p55
        %s253 = sadd.s32 %s27, %s28
        %p254 = scmp.lt.s32.totalorder %s253, 1
        %s255 = scalar_select %p254, %s253, 1
        %s256 = scalar_lea.vmem %s1, %s255
        %p257 = pneg %p86
        %p258 = pneg %p83
        %s259 = sadd.s32 %s27, %s28
        %p260 = scmp.lt.s32.totalorder %s259, 1
        %s261 = scalar_select %p260, %s259, 1
        %s262 = scalar_lea.vmem %s2, %s261
        %p263 = pneg %p114
        %p264 = pneg %p111
        %p265 = pneg %p140
        %p266 = pneg %p137
        %s267 = sand.u32 %s127, 1
        %s268 = scalar_lea.sflag [#allocation3], %s267
        %s269 = sand.u32 %s127, 1
        %s270 = smul.addr %s269, 16
        %s271 = scalar_lea.vmem [#allocation2], %s270
        %p272 = pneg %p166
        %p273 = pneg %p163
        %s274 = sand.u32 %s153, 1
        %s275 = scalar_lea.sflag [#allocation5], %s274
        %s276 = sand.u32 %s153, 1
        %s277 = smul.addr %s276, 8
        %s278 = scalar_lea.vmem [#allocation4], %s277
        %p279 = pneg %p192
        %p280 = pneg %p189
        %p281 = scmp.lt.s32.totalorder %s27, 1
        %s282 = scalar_select %p281, %s27, 1
        %s283 = smul.addr %s282, 2
        %s284 = smul.addr %s283, 8
        %s285 = scalar_lea.vmem %s5, %s284
        %s286 = sadd.s32 %s27, %s28
        %s287 = smul.u32 16, %s286
        %p288 = scmp.lt.s32.totalorder %s287, 31
        %s289 = scalar_select %p288, %s287, 31
        %s290 = smul.addr %s289, 8
        %s291 = scalar_lea.vmem %s0, %s290
        %s292 = sadd.s32 %s27, %s28
        %s293 = smul.u32 16, %s292
        %s294 = sadd.s32 %s27, %s28
        %p295 = scmp.lt.s32.totalorder %s294, 1
        %s296 = scalar_select %p295, %s294, 1
        %s297 = scalar_lea.vmem %s1, %s296
        %s298 = sadd.s32 %s27, %s28
        %s299 = sadd.s32 %s27, %s28
        %p300 = scmp.lt.s32.totalorder %s299, 1
        %s301 = scalar_select %p300, %s299, 1
        %s302 = scalar_lea.vmem %s2, %s301
        %s303 = sadd.s32 %s27, %s28
        %p304 = scmp.lt.s32.totalorder %s27, 1
        %s305 = scalar_select %p304, %s27, 1
        %s306 = smul.addr %s305, 2
        %s307 = smul.addr %s306, 8
        %s308 = scalar_lea.vmem %s5, %s307
        %p309 = scmp.eq.s32.totalorder %s28, 0
        // Predicated region
        $region33: #{tpu_custom_call.1} parent=31 // pred_check
          %p310 = pneg %p309
        $region34: #{tpu_custom_call.1} parent=31 // pred_check_branch
          %312 = sbr.rel (%p310) target = $region36
        $region35: #{tpu_custom_call.1} parent=31 // pred_region
          %vm313 = vcmask 261120
          %314 = vst.msk [vmem:[%s271] sm:$0xff] %vm313, 0.0
          %315 = vst.msk [vmem:[%s271 + $0x8] sm:$0xff] %vm313, 0.0
          %316 = vst.msk [vmem:[%s278] sm:$0xff] %vm313, 0.0
          %vm317 = vcmask 7168
          %318 = vst.msk [vmem:[%s308] sm:$0xff] %vm317, 0.0
          %319 = vst.msk [vmem:[%s308 + $0x8] sm:$0xff] %vm317, 0.0
        $region36: #{tpu_custom_call.1} parent=31 // pred_fallthru
          _
        %v320 = vld [vmem:[%s291] sm:$0xff]
        %v321 = vld [vmem:[%s291 + $0x8] sm:$0xff]
        %v322 = vld [vmem:[%s291 + $0x10] sm:$0xff]
        %v323 = vld [vmem:[%s291 + $0x18] sm:$0xff]
        %v324 = vld [vmem:[%s291 + $0x20] sm:$0xff]
        %v325 = vld [vmem:[%s291 + $0x28] sm:$0xff]
        %v326 = vld [vmem:[%s291 + $0x30] sm:$0xff]
        %v327 = vld [vmem:[%s291 + $0x38] sm:$0xff]
        %v328 = vld [vmem:[%s291 + $0x40] sm:$0xff]
        %v329 = vld [vmem:[%s291 + $0x48] sm:$0xff]
        %v330 = vld [vmem:[%s291 + $0x50] sm:$0xff]
        %v331 = vld [vmem:[%s291 + $0x58] sm:$0xff]
        %v332 = vld [vmem:[%s291 + $0x60] sm:$0xff]
        %v333 = vld [vmem:[%s291 + $0x68] sm:$0xff]
        %v334 = vld [vmem:[%s291 + $0x70] sm:$0xff]
        %v335 = vld [vmem:[%s291 + $0x78] sm:$0xff]
        %v336 = vld [vmem:[%s297] sm:$0x1]
        %v337 = vld [vmem:[%s302] sm:$0x1]
        %vm338 = vcmp.gt.f32.partialorder %v336, 0.0
        %v339 = vmax.f32 %v336, 1e-30
        %v340 = vlog2.pop %v339
        %v341 = vmul.f32 %v340, 0.6931472
        %v342 = vmul.f32 %v341, 0.5
        %v343 = vmul.f32 %v342, 1.442695
        %v344 = vpow.pop %v343
        %v345 = vsel %vm338, %v344, 0.0
        %v346 = vlaneseq
        %v347 = vshrl.u32 %v346, 7
        %v348 = vlaneseq
        %v349 = vshrl.u32 %v348, 7
        %v350 = vsub.s32 0, %v349
        %v351 = vrot.slane %v337, %v350
        %vm352 = vcmp.eq.s32.totalorder %v347, %v351
        %v353 = vsel %vm352, 1, 0
        %v354 = vcvt.s32.f32 %v353
        %v356 = vlaneseq
        %v357 = vshrl.u32 %v356, 7
        %v358 = vsub.s32 0, %v357
        %v359 = vrot.slane %v345, %v358
        %v361 = vmul.f32 %v354, %v359
        %v362 = vld [vmem:[%s271] sm:$0xff]
        %v363 = vld [vmem:[%s271 + $0x8] sm:$0xff]
        %364 = vmatprep.subr.mxu0 0.0
        %365 = vmatpush1.msra.mxu0 %v335
        %366 = vmatprep.subr.mxu0 0.0
        %367 = vmatpush1.msra.mxu0 %v334
        %368 = vmatprep.subr.mxu0 0.0
        %369 = vmatpush1.msra.mxu0 %v333
        %370 = vmatprep.subr.mxu0 0.0
        %371 = vmatpush1.msra.mxu0 %v332
        %372 = vmatprep.subr.mxu0 0.0
        %373 = vmatpush1.msra.mxu0 %v331
        %374 = vmatprep.subr.mxu0 0.0
        %375 = vmatpush1.msra.mxu0 %v330
        %376 = vmatprep.subr.mxu0 0.0
        %377 = vmatpush1.msra.mxu0 %v329
        %378 = vmatprep.subr.mxu0 0.0
        %379 = vmatpush1.msra.mxu0 %v328
        %380 = vmatprep.subr.mxu0 0.0
        %381 = vmatpush1.msra.mxu0 %v327
        %382 = vmatprep.subr.mxu0 0.0
        %383 = vmatpush1.msra.mxu0 %v326
        %384 = vmatprep.subr.mxu0 0.0
        %385 = vmatpush1.msra.mxu0 %v325
        %386 = vmatprep.subr.mxu0 0.0
        %387 = vmatpush1.msra.mxu0 %v324
        %388 = vmatprep.subr.mxu0 0.0
        %389 = vmatpush1.msra.mxu0 %v323
        %390 = vmatprep.subr.mxu0 0.0
        %391 = vmatpush1.msra.mxu0 %v322
        %392 = vmatprep.subr.mxu0 0.0
        %393 = vmatpush1.msra.mxu0 %v321
        %394 = vmatprep.subr.mxu0 0.0
        %395 = vmatpush1.msra.mxu0 %v320
        %396 = vmatprep.subr.mxu0 0.0
        %397 = vmatpush2.msra.mxu0 0.0
        %398 = vmatprep.subr.mxu0 0.0
        %399 = vmatpush2.msra.mxu0 0.0
        %400 = vmatprep.subr.mxu0 0.0
        %401 = vmatpush2.msra.mxu0 0.0
        %402 = vmatprep.subr.mxu0 0.0
        %403 = vmatpush2.msra.mxu0 0.0
        %404 = vmatprep.subr.mxu0 0.0
        %405 = vmatpush2.msra.mxu0 0.0
        %406 = vmatprep.subr.mxu0 0.0
        %407 = vmatpush2.msra.mxu0 0.0
        %408 = vmatprep.subr.mxu0 0.0
        %409 = vmatpush2.msra.mxu0 0.0
        %410 = vmatprep.subr.mxu0 0.0
        %411 = vmatpush2.msra.mxu0 0.0
        %412 = vmatprep.subr.mxu0 0.0
        %413 = vmatpush2.msra.mxu0 0.0
        %414 = vmatprep.subr.mxu0 0.0
        %415 = vmatpush2.msra.mxu0 0.0
        %416 = vmatprep.subr.mxu0 0.0
        %417 = vmatpush2.msra.mxu0 0.0
        %418 = vmatprep.subr.mxu0 0.0
        %419 = vmatpush2.msra.mxu0 0.0
        %420 = vmatprep.subr.mxu0 0.0
        %421 = vmatpush2.msra.mxu0 0.0
        %422 = vmatprep.subr.mxu0 0.0
        %423 = vmatpush2.msra.mxu0 0.0
        %424 = vmatprep.subr.mxu0 0.0
        %425 = vmatpush2.msra.mxu0 0.0
        %426 = vmatprep.subr.mxu0 0.0
        %427 = vmatpush2.msra.mxu0 0.0
        %428 = vmatprep.mubr.f32.mxu0 0.0
        %429 = vmatmul.mubr.f32.gmra.mxu0 %v361
        %v430 = vpop.f32.mrf.mxu0
        %v431 = vadd.f32 0.0, %v430
        %v432 = vpop.f32.mrf.mxu0
        %433 = vmatprep.mubr.f32.mxu0 0.0
        %434 = vmatmul.mubr.f32.gmra.mxu0 %v354
        %v435 = vpop.f32.mrf.mxu0
        %v436 = vadd.f32 0.0, %v435
        %v437 = vpop.f32.mrf.mxu0
        %438 = vdwg.mxu0
        %v439 = vadd.f32 %v362, %v431
        %v440 = vadd.f32 %v363, %v436
        %vm441 = vcmask 261120
        %442 = vst.msk [vmem:[%s271] sm:$0xff] %vm441, %v439
        %443 = vst.msk [vmem:[%s271 + $0x8] sm:$0xff] %vm441, %v440
        %v444 = vld [vmem:[%s278] sm:$0xff]
        %v445 = vmul.f32 %v320, %v320
        %v446 = vmul.f32 %v321, %v321
        %v447 = vmul.f32 %v322, %v322
        %v448 = vmul.f32 %v323, %v323
        %v449 = vmul.f32 %v324, %v324
        %v450 = vmul.f32 %v325, %v325
        %v451 = vmul.f32 %v326, %v326
        %v452 = vmul.f32 %v327, %v327
        %v453 = vmul.f32 %v328, %v328
        %v454 = vmul.f32 %v329, %v329
        %v455 = vmul.f32 %v330, %v330
        %v456 = vmul.f32 %v331, %v331
        %v457 = vmul.f32 %v332, %v332
        %v458 = vmul.f32 %v333, %v333
        %v459 = vmul.f32 %v334, %v334
        %v460 = vmul.f32 %v335, %v335
        %461 = vmatprep.subr.mxu0 0.0
        %462 = vmatpush1.msra.mxu0 %v460
        %463 = vmatprep.subr.mxu0 0.0
        %464 = vmatpush1.msra.mxu0 %v459
        %465 = vmatprep.subr.mxu0 0.0
        %466 = vmatpush1.msra.mxu0 %v458
        %467 = vmatprep.subr.mxu0 0.0
        %468 = vmatpush1.msra.mxu0 %v457
        %469 = vmatprep.subr.mxu0 0.0
        %470 = vmatpush1.msra.mxu0 %v456
        %471 = vmatprep.subr.mxu0 0.0
        %472 = vmatpush1.msra.mxu0 %v455
        %473 = vmatprep.subr.mxu0 0.0
        %474 = vmatpush1.msra.mxu0 %v454
        %475 = vmatprep.subr.mxu0 0.0
        %476 = vmatpush1.msra.mxu0 %v453
        %477 = vmatprep.subr.mxu0 0.0
        %478 = vmatpush1.msra.mxu0 %v452
        %479 = vmatprep.subr.mxu0 0.0
        %480 = vmatpush1.msra.mxu0 %v451
        %481 = vmatprep.subr.mxu0 0.0
        %482 = vmatpush1.msra.mxu0 %v450
        %483 = vmatprep.subr.mxu0 0.0
        %484 = vmatpush1.msra.mxu0 %v449
        %485 = vmatprep.subr.mxu0 0.0
        %486 = vmatpush1.msra.mxu0 %v448
        %487 = vmatprep.subr.mxu0 0.0
        %488 = vmatpush1.msra.mxu0 %v447
        %489 = vmatprep.subr.mxu0 0.0
        %490 = vmatpush1.msra.mxu0 %v446
        %491 = vmatprep.subr.mxu0 0.0
        %492 = vmatpush1.msra.mxu0 %v445
        %493 = vmatprep.subr.mxu0 0.0
        %494 = vmatpush2.msra.mxu0 0.0
        %495 = vmatprep.subr.mxu0 0.0
        %496 = vmatpush2.msra.mxu0 0.0
        %497 = vmatprep.subr.mxu0 0.0
        %498 = vmatpush2.msra.mxu0 0.0
        %499 = vmatprep.subr.mxu0 0.0
        %500 = vmatpush2.msra.mxu0 0.0
        %501 = vmatprep.subr.mxu0 0.0
        %502 = vmatpush2.msra.mxu0 0.0
        %503 = vmatprep.subr.mxu0 0.0
        %504 = vmatpush2.msra.mxu0 0.0
        %505 = vmatprep.subr.mxu0 0.0
        %506 = vmatpush2.msra.mxu0 0.0
        %507 = vmatprep.subr.mxu0 0.0
        %508 = vmatpush2.msra.mxu0 0.0
        %509 = vmatprep.subr.mxu0 0.0
        %510 = vmatpush2.msra.mxu0 0.0
        %511 = vmatprep.subr.mxu0 0.0
        %512 = vmatpush2.msra.mxu0 0.0
        %513 = vmatprep.subr.mxu0 0.0
        %514 = vmatpush2.msra.mxu0 0.0
        %515 = vmatprep.subr.mxu0 0.0
        %516 = vmatpush2.msra.mxu0 0.0
        %517 = vmatprep.subr.mxu0 0.0
        %518 = vmatpush2.msra.mxu0 0.0
        %519 = vmatprep.subr.mxu0 0.0
        %520 = vmatpush2.msra.mxu0 0.0
        %521 = vmatprep.subr.mxu0 0.0
        %522 = vmatpush2.msra.mxu0 0.0
        %523 = vmatprep.subr.mxu0 0.0
        %524 = vmatpush2.msra.mxu0 0.0
        %525 = vmatprep.mubr.f32.mxu0 0.0
        %526 = vmatmul.mubr.f32.gmra.mxu0 %v354
        %v527 = vpop.f32.mrf.mxu0
        %v528 = vadd.f32 0.0, %v527
        %v529 = vpop.f32.mrf.mxu0
        %530 = vdwg.mxu0
        %v531 = vadd.f32 %v444, %v528
        %532 = vst.msk [vmem:[%s278] sm:$0xff] %vm441, %v531
        %v533 = vld [vmem:[%s308] sm:$0xff]
        %v534 = vld [vmem:[%s308 + $0x8] sm:$0xff]
        %535 = vmatprep.subr.mxu0 0.0
        %536 = vmatpush1.msra.mxu0 1.0
        %537 = vmatprep.subr.mxu0 0.0
        %538 = vmatpush1.msra.mxu0 1.0
        %539 = vmatprep.subr.mxu0 0.0
        %540 = vmatpush1.msra.mxu0 1.0
        %541 = vmatprep.subr.mxu0 0.0
        %542 = vmatpush1.msra.mxu0 1.0
        %543 = vmatprep.subr.mxu0 0.0
        %544 = vmatpush1.msra.mxu0 1.0
        %545 = vmatprep.subr.mxu0 0.0
        %546 = vmatpush1.msra.mxu0 1.0
        %547 = vmatprep.subr.mxu0 0.0
        %548 = vmatpush1.msra.mxu0 1.0
        %549 = vmatprep.subr.mxu0 0.0
        %550 = vmatpush1.msra.mxu0 1.0
        %551 = vmatprep.subr.mxu0 0.0
        %552 = vmatpush1.msra.mxu0 1.0
        %553 = vmatprep.subr.mxu0 0.0
        %554 = vmatpush1.msra.mxu0 1.0
        %555 = vmatprep.subr.mxu0 0.0
        %556 = vmatpush1.msra.mxu0 1.0
        %557 = vmatprep.subr.mxu0 0.0
        %558 = vmatpush1.msra.mxu0 1.0
        %559 = vmatprep.subr.mxu0 0.0
        %560 = vmatpush1.msra.mxu0 1.0
        %561 = vmatprep.subr.mxu0 0.0
        %562 = vmatpush1.msra.mxu0 1.0
        %563 = vmatprep.subr.mxu0 0.0
        %564 = vmatpush1.msra.mxu0 1.0
        %565 = vmatprep.subr.mxu0 0.0
        %566 = vmatpush1.msra.mxu0 1.0
        %567 = vmatprep.subr.mxu0 0.0
        %568 = vmatpush2.msra.mxu0 0.0
        %569 = vmatprep.subr.mxu0 0.0
        %570 = vmatpush2.msra.mxu0 0.0
        %571 = vmatprep.subr.mxu0 0.0
        %572 = vmatpush2.msra.mxu0 0.0
        %573 = vmatprep.subr.mxu0 0.0
        %574 = vmatpush2.msra.mxu0 0.0
        %575 = vmatprep.subr.mxu0 0.0
        %576 = vmatpush2.msra.mxu0 0.0
        %577 = vmatprep.subr.mxu0 0.0
        %578 = vmatpush2.msra.mxu0 0.0
        %579 = vmatprep.subr.mxu0 0.0
        %580 = vmatpush2.msra.mxu0 0.0
        %581 = vmatprep.subr.mxu0 0.0
        %582 = vmatpush2.msra.mxu0 0.0
        %583 = vmatprep.subr.mxu0 0.0
        %584 = vmatpush2.msra.mxu0 0.0
        %585 = vmatprep.subr.mxu0 0.0
        %586 = vmatpush2.msra.mxu0 0.0
        %587 = vmatprep.subr.mxu0 0.0
        %588 = vmatpush2.msra.mxu0 0.0
        %589 = vmatprep.subr.mxu0 0.0
        %590 = vmatpush2.msra.mxu0 0.0
        %591 = vmatprep.subr.mxu0 0.0
        %592 = vmatpush2.msra.mxu0 0.0
        %593 = vmatprep.subr.mxu0 0.0
        %594 = vmatpush2.msra.mxu0 0.0
        %595 = vmatprep.subr.mxu0 0.0
        %596 = vmatpush2.msra.mxu0 0.0
        %597 = vmatprep.subr.mxu0 0.0
        %598 = vmatpush2.msra.mxu0 0.0
        %599 = vmatprep.mubr.f32.mxu0 0.0
        %600 = vmatmul.mubr.f32.gmra.mxu0 %v361
        %v601 = vpop.f32.mrf.mxu0
        %v602 = vadd.f32 0.0, %v601
        %v603 = vpop.f32.mrf.mxu0
        %604 = vmatprep.mubr.f32.mxu0 0.0
        %605 = vmatmul.mubr.f32.gmra.mxu0 %v354
        %v606 = vpop.f32.mrf.mxu0
        %v607 = vadd.f32 0.0, %v606
        %v608 = vpop.f32.mrf.mxu0
        %609 = vdwg.mxu0
        %v610 = vadd.f32 %v533, %v602
        %v611 = vadd.f32 %v534, %v607
        %vm612 = vcmask 7168
        %613 = vst.msk [vmem:[%s308] sm:$0xff] %vm612, %v610
        %614 = vst.msk [vmem:[%s308 + $0x8] sm:$0xff] %vm612, %v611
        %s615 = sand.u32 %s127, 1
        %s616 = scalar_lea.sflag [#allocation3], %s615
        %s617 = sand.u32 %s127, 1
        %s618 = smul.addr %s617, 16
        %s619 = scalar_lea.vmem [#allocation2], %s618
        %s620 = sand.u32 %s153, 1
        %s621 = scalar_lea.sflag [#allocation5], %s620
        %s622 = sand.u32 %s153, 1
        %s623 = smul.addr %s622, 8
        %s624 = scalar_lea.vmem [#allocation4], %s623
        %p625 = scmp.lt.s32.totalorder %s27, 1
        %s626 = scalar_select %p625, %s27, 1
        %s627 = smul.addr %s626, 2
        %s628 = smul.addr %s627, 8
        %s629 = scalar_lea.vmem %s5, %s628
        // Predicated region
        $region37: #{tpu_custom_call.1} parent=31 // pred_check
          %p630 = pneg %p137
        $region38: #{tpu_custom_call.1} parent=31 // pred_check_branch
          %632 = sbr.rel (%p630) target = $region40
        $region39: #{tpu_custom_call.1} parent=31 // pred_region
          %s634 = ssub.s32 256, 256
          %635 = vsyncadd %s616, %s634
          %s636 = smul.addr %s27, 2
          %s637 = smul.addr %s636, 128
          %s638 = scalar_lea.hbm %s3, %s637
          %s639 = sshll.u32 %s619, 4
          %s640 = int_to_ptr.vmem [resolvable:$true] %s639
          %645 = dma.vmem_to_hbm [thread:$0]  %s640, 256, %s638, %s616, 128, 128, 8
        $region40: #{tpu_custom_call.1} parent=31 // pred_fallthru
          _
        // Predicated region
        $region41: #{tpu_custom_call.1} parent=31 // pred_check
          %p646 = pneg %p163
        $region42: #{tpu_custom_call.1} parent=31 // pred_check_branch
          %648 = sbr.rel (%p646) target = $region44
        $region43: #{tpu_custom_call.1} parent=31 // pred_region
          %s650 = ssub.s32 128, 128
          %651 = vsyncadd %s621, %s650
          %s652 = smul.addr %s27, 128
          %s653 = scalar_lea.hbm %s4, %s652
          %s655 = sshll.u32 %s624, 4
          %s656 = int_to_ptr.vmem [resolvable:$true] %s655
          %658 = dma.vmem_to_hbm [thread:$0]  %s656, 128, %s653, %s621
        $region44: #{tpu_custom_call.1} parent=31 // pred_fallthru
          _
        // Predicated region
        $region45: #{tpu_custom_call.1} parent=31 // pred_check
          %p659 = pneg %p189
        $region46: #{tpu_custom_call.1} parent=31 // pred_check_branch
          %661 = sbr.rel (%p659) target = $region48
        $region47: #{tpu_custom_call.1} parent=31 // pred_region
          _
        $region48: #{tpu_custom_call.1} parent=31 // pred_fallthru
          _
      $region32: #{tpu_custom_call.1} parent=5 // pred_fallthru
        _
      %p662 = scmp.le.s32.totalorder 2, %s18
      // Predicated region
      $region49: #{tpu_custom_call.1} parent=5 // pred_check
        %p663 = pneg %p662
      $region50: #{tpu_custom_call.1} parent=5 // pred_check_branch
        %665 = sbr.rel (%p663) target = $region52
      $region51: #{tpu_custom_call.1} parent=5 // pred_region
        %s666 = ssub.s32 %s18, 2
        // Predicated region
        $region53: #{tpu_custom_call.1} parent=51 // pred_check
          %p667 = pneg %p143
        $region54: #{tpu_custom_call.1} parent=51 // pred_check_branch
          %669 = sbr.rel (%p667) target = $region56
        $region55: #{tpu_custom_call.1} parent=51 // pred_region
          %s670 = sand.u32 %s128, 1
          %s671 = scalar_lea.sflag [#allocation3], %s670
          %s672 = sand.u32 %s128, 1
          %s673 = smul.addr %s672, 16
          %s674 = scalar_lea.vmem [#allocation2], %s673
          %675 = dma.done %s671, 256
        $region56: #{tpu_custom_call.1} parent=51 // pred_fallthru
          _
        // Predicated region
        $region57: #{tpu_custom_call.1} parent=51 // pred_check
          %p676 = pneg %p169
        $region58: #{tpu_custom_call.1} parent=51 // pred_check_branch
          %678 = sbr.rel (%p676) target = $region60
        $region59: #{tpu_custom_call.1} parent=51 // pred_region
          %s679 = sand.u32 %s154, 1
          %s680 = scalar_lea.sflag [#allocation5], %s679
          %s681 = sand.u32 %s154, 1
          %s682 = smul.addr %s681, 8
          %s683 = scalar_lea.vmem [#allocation4], %s682
          %684 = dma.done %s680, 128
        $region60: #{tpu_custom_call.1} parent=51 // pred_fallthru
          _
        // Predicated region
        $region61: #{tpu_custom_call.1} parent=51 // pred_check
          %p685 = pneg %p195
        $region62: #{tpu_custom_call.1} parent=51 // pred_check_branch
          %687 = sbr.rel (%p685) target = $region64
        $region63: #{tpu_custom_call.1} parent=51 // pred_region
          %p688 = scmp.lt.s32.totalorder %s29, 1
          %s689 = scalar_select %p688, %s29, 1
          %s690 = smul.addr %s689, 2
          %s691 = smul.addr %s690, 8
          %s692 = scalar_lea.vmem %s5, %s691
        $region64: #{tpu_custom_call.1} parent=51 // pred_fallthru
          _
      $region52: #{tpu_custom_call.1} parent=5 // pred_fallthru
        _
    $region6: #{tpu_custom_call.1} parent=1 // loop_footer
      %s22 = sadd.s32 1, %s18
    $region7: #{tpu_custom_call.1} parent=1 // loop_footer_branch
      %17 = sbr.rel target = $region3
    $region8: #{tpu_custom_call.1} parent=1 // loop_exit
      _
    %693 = vsyncpa [#allocation3], 1
    %s694 = scalar_lea.sflag [#allocation3], 1
    %695 = vsyncpa %s694, 1
    %696 = vsyncpa [#allocation5], 1
    %s697 = scalar_lea.sflag [#allocation5], 1
    %698 = vsyncpa %s697, 1

</llo_original>
